<compile_context>
chip_gen: v7x
topology: tpu7x:2x2x1
jax: 0.10.0
libtpu: 0.0.40
codegen_flags: <defaults>
</compile_context>

<pallas_src>
import functools

import jax
import jax.numpy as jnp
from jax.experimental import pallas as pl
from jax.experimental.pallas import tpu as pltpu


_LOGDET_LANES = 128  # lane-dense logdet output block width


def _round_up(x, m):
    return ((x + m - 1) // m) * m


def _coupling_kernel(
    x_ref, mask_ref,
    wst1_ref, bst1_ref,
    ws2_ref, bs2_ref, ws3_ref, bs3_ref,
    wt2_ref, bt2_ref, wt3_ref, bt3_ref,
    y_ref, logdet_ref,
    *, num_hidden: int, mode_direct: bool, mxu_dtype,
):
    x = x_ref[...]                      # [TB, D] f32
    mask = mask_ref[...]                # [1, D], broadcasts over batch
    one_minus_mask = 1.0 - mask

    masked_x = (x * mask).astype(mxu_dtype)

    def mm(a, w_ref, b_ref):
        # MXU matmul with f32 accumulate; bias add in f32.
        return (
            jnp.dot(a, w_ref[...].astype(mxu_dtype),
                    preferred_element_type=jnp.float32)
            + b_ref[...]
        )

    # Fused first layer for both nets (shared LHS -> one wide MXU pass).
    h0 = mm(masked_x, wst1_ref, bst1_ref)                 # [TB, 2H] f32
    hs = jnp.tanh(h0[:, :num_hidden]).astype(mxu_dtype)   # scale branch
    ht = jnp.maximum(h0[:, num_hidden:], 0.0).astype(mxu_dtype)  # translate branch

    # scale_net: (fused L1) -> tanh -> Linear -> tanh -> Linear
    hs = jnp.tanh(mm(hs, ws2_ref, bs2_ref)).astype(mxu_dtype)
    log_s = mm(hs, ws3_ref, bs3_ref) * one_minus_mask

    # translate_net: (fused L1) -> relu -> Linear -> relu -> Linear
    ht = jnp.maximum(mm(ht, wt2_ref, bt2_ref), 0.0).astype(mxu_dtype)
    t = mm(ht, wt3_ref, bt3_ref) * one_minus_mask

    if mode_direct:
        y = x * jnp.exp(log_s) + t
        ld = jnp.sum(log_s, axis=-1, keepdims=True)
    else:
        y = (x - t) * jnp.exp(-log_s)
        ld = -jnp.sum(log_s, axis=-1, keepdims=True)

    y_ref[...] = y.astype(y_ref.dtype)
    # Lane-dense store: broadcast the (TB, 1) sum across 128 lanes.
    logdet_ref[...] = jnp.broadcast_to(ld, logdet_ref.shape)


def coupling_layer_forward(inputs, mask, params, mode="direct", *,
                           block_batch=256, mxu_dtype=jnp.float32):
    """Pallas implementation of CouplingLayer.forward (no cond_inputs).

    inputs: [B, num_inputs] float32
    mask:   [num_inputs]    float32 (binary)
    params: dict from init_params (weights stored [in, out]).
    Returns (outputs [B, num_inputs], logdet [B, 1]).
    """
    B, D = inputs.shape
    H = params["ws2"].shape[0]

    # Batch tile: multiple of 8 (f32 sublane); capped so the working set
    # (x/y tiles double-buffered + activations + resident weights) stays well
    # under v7x's 64 MiB physical / 32 MiB scoped VMEM.
    tb = max(8, _round_up(min(block_batch, B), 8))
    b_pad = _round_up(B, tb)

    x = inputs.astype(jnp.float32)
    if b_pad != B:
        x = jnp.pad(x, ((0, b_pad - B), (0, 0)))

    mask2d = mask.reshape(1, D).astype(jnp.float32)

    # Pack layer-1 weights of both nets: one [D, 2H] matmul on the shared LHS.
    w_st1 = jnp.concatenate([params["ws1"], params["wt1"]], axis=1)
    b_st1 = jnp.concatenate([params["bs1"], params["bt1"]], axis=1)

    kernel = functools.partial(
        _coupling_kernel,
        num_hidden=H,
        mode_direct=(mode == "direct"),
        mxu_dtype=mxu_dtype,
    )

    def batch_spec(shape):
        return pl.BlockSpec(shape, lambda i: (i, 0))

    def const_spec(arr):
        return pl.BlockSpec(arr.shape, lambda i: (0, 0))

    weight_args = (
        w_st1, b_st1,
        params["ws2"], params["bs2"], params["ws3"], params["bs3"],
        params["wt2"], params["bt2"], params["wt3"], params["bt3"],
    )

    in_specs = (
        [batch_spec((tb, D)), const_spec(mask2d)]
        + [const_spec(w) for w in weight_args]
    )
    out_specs = (
        batch_spec((tb, D)),
        batch_spec((tb, _LOGDET_LANES)),
    )

    # Advisory cost estimate for the XLA scheduler.
    flops = 2 * b_pad * (D * 2 * H + 2 * H * H + 2 * H * D)
    transcendentals = b_pad * (2 * H + D)   # tanh x2 layers + exp(log_s)
    bytes_accessed = 4 * (
        2 * b_pad * D + b_pad * _LOGDET_LANES
        + sum(int(w.size) for w in weight_args) + D
    )

    y, ld = pl.pallas_call(
        kernel,
        out_shape=(
            jax.ShapeDtypeStruct((b_pad, D), jnp.float32),
            jax.ShapeDtypeStruct((b_pad, _LOGDET_LANES), jnp.float32),
        ),
        grid=(b_pad // tb,),
        in_specs=in_specs,
        out_specs=out_specs,
        compiler_params=pltpu.CompilerParams(
            dimension_semantics=("parallel",),
            vmem_limit_bytes=32 * 1024 * 1024,
        ),
        cost_estimate=pl.CostEstimate(
            flops=flops,
            transcendentals=transcendentals,
            bytes_accessed=bytes_accessed,
        ),
    )(x, mask2d, *weight_args)

    return y[:B], ld[:B, :1]


def _orthogonal(key, rows, cols):
    # Deterministic orthogonal init (mirrors nn.init.orthogonal_ semantics).
    a = jax.random.normal(key, (max(rows, cols), min(rows, cols)), jnp.float32)
    q, r = jnp.linalg.qr(a)
    q = q * jnp.sign(jnp.diagonal(r))[None, :]
    if rows < cols:
        q = q.T
    return q[:rows, :cols]


def init_params(key, num_inputs, num_hidden):
    ks = jax.random.split(key, 6)
    # weights stored [in, out]; biases zero (as in the module's init fn).
    return {
        "ws1": _orthogonal(ks[0], num_inputs, num_hidden),
        "bs1": jnp.zeros((1, num_hidden), jnp.float32),
        "ws2": _orthogonal(ks[1], num_hidden, num_hidden),
        "bs2": jnp.zeros((1, num_hidden), jnp.float32),
        "ws3": _orthogonal(ks[2], num_hidden, num_inputs),
        "bs3": jnp.zeros((1, num_inputs), jnp.float32),
        "wt1": _orthogonal(ks[3], num_inputs, num_hidden),
        "bt1": jnp.zeros((1, num_hidden), jnp.float32),
        "wt2": _orthogonal(ks[4], num_hidden, num_hidden),
        "bt2": jnp.zeros((1, num_hidden), jnp.float32),
        "wt3": _orthogonal(ks[5], num_hidden, num_inputs),
        "bt3": jnp.zeros((1, num_inputs), jnp.float32),
    }


def _reference_forward(inputs, mask, params, mode="direct"):
    # Pure-JAX reference mirroring the PyTorch forward exactly.
    mx = inputs * mask
    h = jnp.tanh(mx @ params["ws1"] + params["bs1"])
    h = jnp.tanh(h @ params["ws2"] + params["bs2"])
    log_s = (h @ params["ws3"] + params["bs3"]) * (1 - mask)
    g = jax.nn.relu(mx @ params["wt1"] + params["bt1"])
    g = jax.nn.relu(g @ params["wt2"] + params["bt2"])
    t = (g @ params["wt3"] + params["bt3"]) * (1 - mask)
    if mode == "direct":
        return inputs * jnp.exp(log_s) + t, jnp.sum(log_s, -1, keepdims=True)
    return (inputs - t) * jnp.exp(-log_s), -jnp.sum(log_s, -1, keepdims=True)


if __name__ == "__main__":
    num_inputs = 8
    num_hidden = 32
    batch = 60  # non-multiple of the tile -> exercises batch padding + grid

    key = jax.random.PRNGKey(0)
    k_x, k_p = jax.random.split(key)

    inputs = jax.random.normal(k_x, (batch, num_inputs), jnp.float32)
    # alternating binary mask, as typically used with RealNVP coupling layers
    mask = (jnp.arange(num_inputs) % 2).astype(jnp.float32)
    params = init_params(k_p, num_inputs, num_hidden)

    # TODO(synk): num_cond_inputs path omitted (module called with cond_inputs=None here).

    # direct mode (f32 MXU path, exact vs f32 reference)
    out, logdet = coupling_layer_forward(
        inputs, mask, params, mode="direct", block_batch=16)
    jax.block_until_ready((out, logdet))

    ref_out, ref_logdet = _reference_forward(inputs, mask, params, mode="direct")
    assert jnp.allclose(out, ref_out, atol=1e-5, rtol=1e-5)
    assert jnp.allclose(logdet, ref_logdet, atol=1e-5, rtol=1e-5)

    # inverse mode round-trip
    back, inv_logdet = coupling_layer_forward(
        out, mask, params, mode="inverse", block_batch=16)
    jax.block_until_ready((back, inv_logdet))
    assert jnp.allclose(back, inputs, atol=1e-4, rtol=1e-4)
    assert jnp.allclose(inv_logdet, -ref_logdet, atol=1e-4, rtol=1e-4)

    # bf16-MXU path (recommended on v5e/v6e/v7x for large D/H); sanity only.
    out_bf16, logdet_bf16 = coupling_layer_forward(
        inputs, mask, params, mode="direct", block_batch=16,
        mxu_dtype=jnp.bfloat16)
    jax.block_until_ready((out_bf16, logdet_bf16))
    assert bool(jnp.all(jnp.isfinite(out_bf16)))
    assert bool(jnp.all(jnp.isfinite(logdet_bf16)))

    print("KERNEL_OK")
</pallas_src>

<mosaic_0001>
module attributes {stable_mosaic.version = 11 : i64} {
  func.func @_coupling_kernel(%arg0: i32, %arg1: memref<16x8xf32, #tpu.memory_space<vmem>>, %arg2: memref<1x8xf32, #tpu.memory_space<vmem>>, %arg3: memref<8x64xf32, #tpu.memory_space<vmem>>, %arg4: memref<1x64xf32, #tpu.memory_space<vmem>>, %arg5: memref<32x32xf32, #tpu.memory_space<vmem>>, %arg6: memref<1x32xf32, #tpu.memory_space<vmem>>, %arg7: memref<32x8xf32, #tpu.memory_space<vmem>>, %arg8: memref<1x8xf32, #tpu.memory_space<vmem>>, %arg9: memref<32x32xf32, #tpu.memory_space<vmem>>, %arg10: memref<1x32xf32, #tpu.memory_space<vmem>>, %arg11: memref<32x8xf32, #tpu.memory_space<vmem>>, %arg12: memref<1x8xf32, #tpu.memory_space<vmem>>, %arg13: memref<16x8xf32, #tpu.memory_space<vmem>>, %arg14: memref<16x128xf32, #tpu.memory_space<vmem>>) attributes {dimension_semantics = [#tpu.dimension_semantics<parallel>], iteration_bounds = array<i64: 4>, scalar_prefetch = 0 : i64, scratch_operands = 0 : i64, tpu.core_type = #tpu.core_type<tc>, window_params = [{transform_indices = @transform_0, window_bounds = array<i64: 16, 8>}, {pipeline_mode = #tpu.pipeline_mode<synchronous>, transform_indices = @transform_1, window_bounds = array<i64: 1, 8>}, {pipeline_mode = #tpu.pipeline_mode<synchronous>, transform_indices = @transform_2, window_bounds = array<i64: 8, 64>}, {pipeline_mode = #tpu.pipeline_mode<synchronous>, transform_indices = @transform_3, window_bounds = array<i64: 1, 64>}, {pipeline_mode = #tpu.pipeline_mode<synchronous>, transform_indices = @transform_4, window_bounds = array<i64: 32, 32>}, {pipeline_mode = #tpu.pipeline_mode<synchronous>, transform_indices = @transform_5, window_bounds = array<i64: 1, 32>}, {pipeline_mode = #tpu.pipeline_mode<synchronous>, transform_indices = @transform_6, window_bounds = array<i64: 32, 8>}, {pipeline_mode = #tpu.pipeline_mode<synchronous>, transform_indices = @transform_7, window_bounds = array<i64: 1, 8>}, {pipeline_mode = #tpu.pipeline_mode<synchronous>, transform_indices = @transform_8, window_bounds = array<i64: 32, 32>}, {pipeline_mode = #tpu.pipeline_mode<synchronous>, transform_indices = @transform_9, window_bounds = array<i64: 1, 32>}, {pipeline_mode = #tpu.pipeline_mode<synchronous>, transform_indices = @transform_10, window_bounds = array<i64: 32, 8>}, {pipeline_mode = #tpu.pipeline_mode<synchronous>, transform_indices = @transform_11, window_bounds = array<i64: 1, 8>}, {transform_indices = @transform_12, window_bounds = array<i64: 16, 8>}, {transform_indices = @transform_13, window_bounds = array<i64: 16, 128>}]} {
    %c0 = arith.constant 0 : index
    %c0_0 = arith.constant 0 : index
    %0 = vector.load %arg1[%c0, %c0_0] : memref<16x8xf32, #tpu.memory_space<vmem>>, vector<16x8xf32>
    %c0_1 = arith.constant 0 : index
    %c0_2 = arith.constant 0 : index
    %1 = vector.load %arg2[%c0_1, %c0_2] : memref<1x8xf32, #tpu.memory_space<vmem>>, vector<1x8xf32>
    %cst = arith.constant 1.000000e+00 : f32
    %2 = vector.broadcast %cst : f32 to vector<1x8xf32>
    %3 = arith.subf %2, %1 : vector<1x8xf32>
    %4 = vector.broadcast %1 : vector<1x8xf32> to vector<16x8xf32>
    %5 = arith.mulf %0, %4 : vector<16x8xf32>
    %c0_3 = arith.constant 0 : index
    %c0_4 = arith.constant 0 : index
    %6 = vector.load %arg3[%c0_3, %c0_4] : memref<8x64xf32, #tpu.memory_space<vmem>>, vector<8x64xf32>
    %cst_5 = arith.constant dense<0.000000e+00> : vector<16x64xf32>
    %7 = tpu.matmul %5, %6, %cst_5 {dimension_numbers = #tpu.dot_dimension_numbers<[1], [0], [0], [1], [0, 0, 1, 1], [], []>} : vector<16x8xf32>, vector<8x64xf32>, vector<16x64xf32> -> vector<16x64xf32>
    %c0_6 = arith.constant 0 : index
    %c0_7 = arith.constant 0 : index
    %8 = vector.load %arg4[%c0_6, %c0_7] : memref<1x64xf32, #tpu.memory_space<vmem>>, vector<1x64xf32>
    %9 = vector.broadcast %8 : vector<1x64xf32> to vector<16x64xf32>
    %10 = arith.addf %7, %9 : vector<16x64xf32>
    %11 = vector.extract_strided_slice %10 {offsets = [0, 0], sizes = [16, 32], strides = [1, 1]} : vector<16x64xf32> to vector<16x32xf32>
    %12 = math.tanh %11 : vector<16x32xf32>
    %13 = vector.extract_strided_slice %10 {offsets = [0, 32], sizes = [16, 32], strides = [1, 1]} : vector<16x64xf32> to vector<16x32xf32>
    %cst_8 = arith.constant 0.000000e+00 : f32
    %14 = vector.broadcast %cst_8 : f32 to vector<16x32xf32>
    %15 = arith.maximumf %13, %14 : vector<16x32xf32>
    %c0_9 = arith.constant 0 : index
    %c0_10 = arith.constant 0 : index
    %16 = vector.load %arg5[%c0_9, %c0_10] : memref<32x32xf32, #tpu.memory_space<vmem>>, vector<32x32xf32>
    %cst_11 = arith.constant dense<0.000000e+00> : vector<16x32xf32>
    %17 = tpu.matmul %12, %16, %cst_11 {dimension_numbers = #tpu.dot_dimension_numbers<[1], [0], [0], [1], [0, 0, 1, 1], [], []>} : vector<16x32xf32>, vector<32x32xf32>, vector<16x32xf32> -> vector<16x32xf32>
    %c0_12 = arith.constant 0 : index
    %c0_13 = arith.constant 0 : index
    %18 = vector.load %arg6[%c0_12, %c0_13] : memref<1x32xf32, #tpu.memory_space<vmem>>, vector<1x32xf32>
    %19 = vector.broadcast %18 : vector<1x32xf32> to vector<16x32xf32>
    %20 = arith.addf %17, %19 : vector<16x32xf32>
    %21 = math.tanh %20 : vector<16x32xf32>
    %c0_14 = arith.constant 0 : index
    %c0_15 = arith.constant 0 : index
    %22 = vector.load %arg7[%c0_14, %c0_15] : memref<32x8xf32, #tpu.memory_space<vmem>>, vector<32x8xf32>
    %cst_16 = arith.constant dense<0.000000e+00> : vector<16x8xf32>
    %23 = tpu.matmul %21, %22, %cst_16 {dimension_numbers = #tpu.dot_dimension_numbers<[1], [0], [0], [1], [0, 0, 1, 1], [], []>} : vector<16x32xf32>, vector<32x8xf32>, vector<16x8xf32> -> vector<16x8xf32>
    %c0_17 = arith.constant 0 : index
    %c0_18 = arith.constant 0 : index
    %24 = vector.load %arg8[%c0_17, %c0_18] : memref<1x8xf32, #tpu.memory_space<vmem>>, vector<1x8xf32>
    %25 = vector.broadcast %24 : vector<1x8xf32> to vector<16x8xf32>
    %26 = arith.addf %23, %25 : vector<16x8xf32>
    %27 = vector.broadcast %3 : vector<1x8xf32> to vector<16x8xf32>
    %28 = arith.mulf %26, %27 : vector<16x8xf32>
    %c0_19 = arith.constant 0 : index
    %c0_20 = arith.constant 0 : index
    %29 = vector.load %arg9[%c0_19, %c0_20] : memref<32x32xf32, #tpu.memory_space<vmem>>, vector<32x32xf32>
    %cst_21 = arith.constant dense<0.000000e+00> : vector<16x32xf32>
    %30 = tpu.matmul %15, %29, %cst_21 {dimension_numbers = #tpu.dot_dimension_numbers<[1], [0], [0], [1], [0, 0, 1, 1], [], []>} : vector<16x32xf32>, vector<32x32xf32>, vector<16x32xf32> -> vector<16x32xf32>
    %c0_22 = arith.constant 0 : index
    %c0_23 = arith.constant 0 : index
    %31 = vector.load %arg10[%c0_22, %c0_23] : memref<1x32xf32, #tpu.memory_space<vmem>>, vector<1x32xf32>
    %32 = vector.broadcast %31 : vector<1x32xf32> to vector<16x32xf32>
    %33 = arith.addf %30, %32 : vector<16x32xf32>
    %cst_24 = arith.constant 0.000000e+00 : f32
    %34 = vector.broadcast %cst_24 : f32 to vector<16x32xf32>
    %35 = arith.maximumf %33, %34 : vector<16x32xf32>
    %c0_25 = arith.constant 0 : index
    %c0_26 = arith.constant 0 : index
    %36 = vector.load %arg11[%c0_25, %c0_26] : memref<32x8xf32, #tpu.memory_space<vmem>>, vector<32x8xf32>
    %cst_27 = arith.constant dense<0.000000e+00> : vector<16x8xf32>
    %37 = tpu.matmul %35, %36, %cst_27 {dimension_numbers = #tpu.dot_dimension_numbers<[1], [0], [0], [1], [0, 0, 1, 1], [], []>} : vector<16x32xf32>, vector<32x8xf32>, vector<16x8xf32> -> vector<16x8xf32>
    %c0_28 = arith.constant 0 : index
    %c0_29 = arith.constant 0 : index
    %38 = vector.load %arg12[%c0_28, %c0_29] : memref<1x8xf32, #tpu.memory_space<vmem>>, vector<1x8xf32>
    %39 = vector.broadcast %38 : vector<1x8xf32> to vector<16x8xf32>
    %40 = arith.addf %37, %39 : vector<16x8xf32>
    %41 = vector.broadcast %3 : vector<1x8xf32> to vector<16x8xf32>
    %42 = arith.mulf %40, %41 : vector<16x8xf32>
    %43 = math.exp %28 : vector<16x8xf32>
    %44 = arith.mulf %0, %43 : vector<16x8xf32>
    %45 = arith.addf %44, %42 : vector<16x8xf32>
    %cst_30 = arith.constant dense<0.000000e+00> : vector<16xf32>
    %46 = vector.multi_reduction <add>, %28, %cst_30 [1] : vector<16x8xf32> to vector<16xf32>
    %47 = vector.shape_cast %46 : vector<16xf32> to vector<16x1xf32>
    %c0_31 = arith.constant 0 : index
    %c0_32 = arith.constant 0 : index
    %48 = vector.load %arg13[%c0_31, %c0_32] : memref<16x8xf32, #tpu.memory_space<vmem>>, vector<16x8xf32>
    tpu.vector_store %arg13[%c0_31, %c0_32], %45 {strides = array<i32>} : memref<16x8xf32, #tpu.memory_space<vmem>>, vector<16x8xf32>,
    %49 = vector.shape_cast %47 : vector<16x1xf32> to vector<16x1xf32>
    %50 = vector.broadcast %49 : vector<16x1xf32> to vector<16x128xf32>
    %c0_33 = arith.constant 0 : index
    %c0_34 = arith.constant 0 : index
    %51 = vector.load %arg14[%c0_33, %c0_34] : memref<16x128xf32, #tpu.memory_space<vmem>>, vector<16x128xf32>
    tpu.vector_store %arg14[%c0_33, %c0_34], %50 {strides = array<i32>} : memref<16x128xf32, #tpu.memory_space<vmem>>, vector<16x128xf32>,
    return
  }
  func.func @transform_0(%arg0: i32) -> (i32, i32) {
    %c0_i32 = arith.constant 0 : i32
    %c0_i32_0 = arith.constant 0 : i32
    return %arg0, %c0_i32 : i32, i32
  }
  func.func @transform_1(%arg0: i32) -> (i32, i32) {
    %c0_i32 = arith.constant 0 : i32
    %c0_i32_0 = arith.constant 0 : i32
    %c0_i32_1 = arith.constant 0 : i32
    return %c0_i32, %c0_i32_0 : i32, i32
  }
  func.func @transform_2(%arg0: i32) -> (i32, i32) {
    %c0_i32 = arith.constant 0 : i32
    %c0_i32_0 = arith.constant 0 : i32
    %c0_i32_1 = arith.constant 0 : i32
    return %c0_i32, %c0_i32_0 : i32, i32
  }
  func.func @transform_3(%arg0: i32) -> (i32, i32) {
    %c0_i32 = arith.constant 0 : i32
    %c0_i32_0 = arith.constant 0 : i32
    %c0_i32_1 = arith.constant 0 : i32
    return %c0_i32, %c0_i32_0 : i32, i32
  }
  func.func @transform_4(%arg0: i32) -> (i32, i32) {
    %c0_i32 = arith.constant 0 : i32
    %c0_i32_0 = arith.constant 0 : i32
    %c0_i32_1 = arith.constant 0 : i32
    return %c0_i32, %c0_i32_0 : i32, i32
  }
  func.func @transform_5(%arg0: i32) -> (i32, i32) {
    %c0_i32 = arith.constant 0 : i32
    %c0_i32_0 = arith.constant 0 : i32
    %c0_i32_1 = arith.constant 0 : i32
    return %c0_i32, %c0_i32_0 : i32, i32
  }
  func.func @transform_6(%arg0: i32) -> (i32, i32) {
    %c0_i32 = arith.constant 0 : i32
    %c0_i32_0 = arith.constant 0 : i32
    %c0_i32_1 = arith.constant 0 : i32
    return %c0_i32, %c0_i32_0 : i32, i32
  }
  func.func @transform_7(%arg0: i32) -> (i32, i32) {
    %c0_i32 = arith.constant 0 : i32
    %c0_i32_0 = arith.constant 0 : i32
    %c0_i32_1 = arith.constant 0 : i32
    return %c0_i32, %c0_i32_0 : i32, i32
  }
  func.func @transform_8(%arg0: i32) -> (i32, i32) {
    %c0_i32 = arith.constant 0 : i32
    %c0_i32_0 = arith.constant 0 : i32
    %c0_i32_1 = arith.constant 0 : i32
    return %c0_i32, %c0_i32_0 : i32, i32
  }
  func.func @transform_9(%arg0: i32) -> (i32, i32) {
    %c0_i32 = arith.constant 0 : i32
    %c0_i32_0 = arith.constant 0 : i32
    %c0_i32_1 = arith.constant 0 : i32
    return %c0_i32, %c0_i32_0 : i32, i32
  }
  func.func @transform_10(%arg0: i32) -> (i32, i32) {
    %c0_i32 = arith.constant 0 : i32
    %c0_i32_0 = arith.constant 0 : i32
    %c0_i32_1 = arith.constant 0 : i32
    return %c0_i32, %c0_i32_0 : i32, i32
  }
  func.func @transform_11(%arg0: i32) -> (i32, i32) {
    %c0_i32 = arith.constant 0 : i32
    %c0_i32_0 = arith.constant 0 : i32
    %c0_i32_1 = arith.constant 0 : i32
    return %c0_i32, %c0_i32_0 : i32, i32
  }
  func.func @transform_12(%arg0: i32) -> (i32, i32) {
    %c0_i32 = arith.constant 0 : i32
    %c0_i32_0 = arith.constant 0 : i32
    return %arg0, %c0_i32 : i32, i32
  }
  func.func @transform_13(%arg0: i32) -> (i32, i32) {
    %c0_i32 = arith.constant 0 : i32
    %c0_i32_0 = arith.constant 0 : i32
    return %arg0, %c0_i32 : i32, i32
  }
}

</mosaic_0001>

<llo_original>
// kernel: tpu_custom_call.1
$region0: #{tpu_custom_call.1}
  #allocation0 [shape = 'u32[]', space=smem, size = 0x4, offset = 0x4, fixed_abs, tag = 'smem constant byte address 0x4 - core index']
  #allocation1 [shape = 'u32[144,128]{1,0:T(1,128)}', space=vmem, size = 0x12000, scoped, tag = 'internal scratch']
  %s0 = inlined_call_operand.vmem [shape: f32[64,8], index: 0, kind: input, shape index: {}]
  %s1 = inlined_call_operand.vmem [shape: f32[1,8], index: 1, kind: input, shape index: {}]
  %s2 = inlined_call_operand.vmem [shape: f32[8,64], index: 2, kind: input, shape index: {}]
  %s3 = inlined_call_operand.vmem [shape: f32[1,64], index: 3, kind: input, shape index: {}]
  %s4 = inlined_call_operand.vmem [shape: f32[32,32], index: 4, kind: input, shape index: {}]
  %s5 = inlined_call_operand.vmem [shape: f32[1,32], index: 5, kind: input, shape index: {}]
  %s6 = inlined_call_operand.vmem [shape: f32[32,8], index: 6, kind: input, shape index: {}]
  %s7 = inlined_call_operand.vmem [shape: f32[1,8], index: 7, kind: input, shape index: {}]
  %s8 = inlined_call_operand.vmem [shape: f32[32,32], index: 8, kind: input, shape index: {}]
  %s9 = inlined_call_operand.vmem [shape: f32[1,32], index: 9, kind: input, shape index: {}]
  %s10 = inlined_call_operand.vmem [shape: f32[32,8], index: 10, kind: input, shape index: {}]
  %s11 = inlined_call_operand.vmem [shape: f32[1,8], index: 11, kind: input, shape index: {}]
  %s12 = inlined_call_operand.vmem [shape: f32[64,8], index: 12, kind: output, shape index: {0}]
  %s13 = inlined_call_operand.hbm [shape: f32[64,128], index: 13, kind: output, shape index: {1}]
  %14 = xla_tuple %s12, %s13
  %s15 = sld [smem:[#allocation0]]
  $region89: #{tpu_custom_call.1} parent=0
    _
  %s17 = ssub.s32 1, %s15
  %s18 = scalar_select 0, %s17, %s15
  $region1: #{tpu_custom_call.1} parent=0
    #allocation2 [shape = 'u8[16384]{0}', space=vmem, size = 0x4000, scoped, tag = 'output window, operand 1']
    #allocation3 [shape = 's32[2]{0}', space=sflag, size = 0x8, scoped, tag = 'scoped memory for tpu_custom_call.1']
    %19 = vsyncpa [#allocation3], 0
    %s20 = scalar_lea.sflag [#allocation3], 1
    %21 = vsyncpa %s20, 0
    loop: start=0, step=1, limit=6
    $region2: #{tpu_custom_call.1} parent=1 // loop_pre_header
      _
    $region3: #{tpu_custom_call.1} parent=1 // loop_header
      %s23 = sphi 0, %s27
      %p24 = scmp.ge.s32.totalorder %s23, 6
      %s33 = sphi 0, %s35
      %s36 = sphi 0, %s33
      %s37 = sphi 0, %s36
      %s53 = sphi 0, %s37
      %s57 = sphi 0, %s57
      %s59 = sphi 0, %s57
      %s60 = sphi 0, %s59
      %s74 = sphi 0, %s60
      %s78 = sphi 0, %s78
      %s80 = sphi 0, %s78
      %s81 = sphi 0, %s80
      %s95 = sphi 0, %s81
      %s99 = sphi 0, %s99
      %s101 = sphi 0, %s99
      %s102 = sphi 0, %s101
      %s116 = sphi 0, %s102
      %s120 = sphi 0, %s120
      %s122 = sphi 0, %s120
      %s123 = sphi 0, %s122
      %s137 = sphi 0, %s123
      %s141 = sphi 0, %s141
      %s143 = sphi 0, %s141
      %s144 = sphi 0, %s143
      %s158 = sphi 0, %s144
      %s162 = sphi 0, %s162
      %s164 = sphi 0, %s162
      %s165 = sphi 0, %s164
      %s179 = sphi 0, %s165
      %s183 = sphi 0, %s183
      %s185 = sphi 0, %s183
      %s186 = sphi 0, %s185
      %s200 = sphi 0, %s186
      %s204 = sphi 0, %s204
      %s206 = sphi 0, %s204
      %s207 = sphi 0, %s206
      %s221 = sphi 0, %s207
      %s225 = sphi 0, %s225
      %s227 = sphi 0, %s225
      %s228 = sphi 0, %s227
      %s242 = sphi 0, %s228
      %s246 = sphi 0, %s246
      %s248 = sphi 0, %s246
      %s249 = sphi 0, %s248
      %s263 = sphi 0, %s249
      %s267 = sphi 0, %s267
      %s269 = sphi 0, %s267
      %s270 = sphi 0, %s269
      %s284 = sphi 0, %s270
      %s290 = sphi 0, %s292
      %s293 = sphi 0, %s290
      %s294 = sphi 0, %s293
      %s310 = sphi 0, %s294
      %s316 = sphi 0, %s318
      %s319 = sphi 0, %s316
      %s320 = sphi 0, %s319
      %s336 = sphi 0, %s320
    $region4: #{tpu_custom_call.1} parent=1 // loop_header_branch
      %26 = sbr.rel (%p24) target = $region8
    $region5: #{tpu_custom_call.1} parent=1 // loop_body
      %s28 = ssub.s32 %s23, 1
      %s29 = ssub.s32 %s23, 2
      %s30 = sadd.s32 %s23, 1
      %s31 = ssub.s32 %s23, %s30
      %p32 = scmp.eq.s32.totalorder %s31, 0
      %s34 = sadd.s32 %s33, 1
      %s35 = scalar_select %p32, %s33, %s34
      %p38 = pneg %p32
      %p39 = scmp.eq.s32.totalorder %s23, 3
      %p40 = por %p38, %p39
      %p41 = scmp.ne.s32.totalorder %s33, %s36
      %p42 = scmp.eq.s32.totalorder %s23, 0
      %p43 = por %p41, %p42
      %p44 = scmp.ne.s32.totalorder %s33, %s36
      %p45 = scmp.eq.s32.totalorder %s28, 3
      %p46 = por %p44, %p45
      %p47 = scmp.ne.s32.totalorder %s36, %s37
      %p48 = scmp.eq.s32.totalorder %s28, 0
      %p49 = por %p47, %p48
      %p50 = scmp.ne.s32.totalorder %s36, %s37
      %p51 = scmp.eq.s32.totalorder %s29, 3
      %p52 = por %p50, %p51
      %p54 = scmp.ne.s32.totalorder %s37, %s53
      %p55 = scmp.eq.s32.totalorder %s29, 0
      %p56 = por %p54, %p55
      %s58 = sadd.s32 %s57, 1
      %p61 = scmp.eq.s32.totalorder %s23, 3
      %p62 = scmp.ne.s32.totalorder %s57, %s59
      %p63 = scmp.eq.s32.totalorder %s23, 0
      %p64 = por %p62, %p63
      %p65 = scmp.ne.s32.totalorder %s57, %s59
      %p66 = scmp.eq.s32.totalorder %s28, 3
      %p67 = por %p65, %p66
      %p68 = scmp.ne.s32.totalorder %s59, %s60
      %p69 = scmp.eq.s32.totalorder %s28, 0
      %p70 = por %p68, %p69
      %p71 = scmp.ne.s32.totalorder %s59, %s60
      %p72 = scmp.eq.s32.totalorder %s29, 3
      %p73 = por %p71, %p72
      %p75 = scmp.ne.s32.totalorder %s60, %s74
      %p76 = scmp.eq.s32.totalorder %s29, 0
      %p77 = por %p75, %p76
      %s79 = sadd.s32 %s78, 1
      %p82 = scmp.eq.s32.totalorder %s23, 3
      %p83 = scmp.ne.s32.totalorder %s78, %s80
      %p84 = scmp.eq.s32.totalorder %s23, 0
      %p85 = por %p83, %p84
      %p86 = scmp.ne.s32.totalorder %s78, %s80
      %p87 = scmp.eq.s32.totalorder %s28, 3
      %p88 = por %p86, %p87
      %p89 = scmp.ne.s32.totalorder %s80, %s81
      %p90 = scmp.eq.s32.totalorder %s28, 0
      %p91 = por %p89, %p90
      %p92 = scmp.ne.s32.totalorder %s80, %s81
      %p93 = scmp.eq.s32.totalorder %s29, 3
      %p94 = por %p92, %p93
      %p96 = scmp.ne.s32.totalorder %s81, %s95
      %p97 = scmp.eq.s32.totalorder %s29, 0
      %p98 = por %p96, %p97
      %s100 = sadd.s32 %s99, 1
      %p103 = scmp.eq.s32.totalorder %s23, 3
      %p104 = scmp.ne.s32.totalorder %s99, %s101
      %p105 = scmp.eq.s32.totalorder %s23, 0
      %p106 = por %p104, %p105
      %p107 = scmp.ne.s32.totalorder %s99, %s101
      %p108 = scmp.eq.s32.totalorder %s28, 3
      %p109 = por %p107, %p108
      %p110 = scmp.ne.s32.totalorder %s101, %s102
      %p111 = scmp.eq.s32.totalorder %s28, 0
      %p112 = por %p110, %p111
      %p113 = scmp.ne.s32.totalorder %s101, %s102
      %p114 = scmp.eq.s32.totalorder %s29, 3
      %p115 = por %p113, %p114
      %p117 = scmp.ne.s32.totalorder %s102, %s116
      %p118 = scmp.eq.s32.totalorder %s29, 0
      %p119 = por %p117, %p118
      %s121 = sadd.s32 %s120, 1
      %p124 = scmp.eq.s32.totalorder %s23, 3
      %p125 = scmp.ne.s32.totalorder %s120, %s122
      %p126 = scmp.eq.s32.totalorder %s23, 0
      %p127 = por %p125, %p126
      %p128 = scmp.ne.s32.totalorder %s120, %s122
      %p129 = scmp.eq.s32.totalorder %s28, 3
      %p130 = por %p128, %p129
      %p131 = scmp.ne.s32.totalorder %s122, %s123
      %p132 = scmp.eq.s32.totalorder %s28, 0
      %p133 = por %p131, %p132
      %p134 = scmp.ne.s32.totalorder %s122, %s123
      %p135 = scmp.eq.s32.totalorder %s29, 3
      %p136 = por %p134, %p135
      %p138 = scmp.ne.s32.totalorder %s123, %s137
      %p139 = scmp.eq.s32.totalorder %s29, 0
      %p140 = por %p138, %p139
      %s142 = sadd.s32 %s141, 1
      %p145 = scmp.eq.s32.totalorder %s23, 3
      %p146 = scmp.ne.s32.totalorder %s141, %s143
      %p147 = scmp.eq.s32.totalorder %s23, 0
      %p148 = por %p146, %p147
      %p149 = scmp.ne.s32.totalorder %s141, %s143
      %p150 = scmp.eq.s32.totalorder %s28, 3
      %p151 = por %p149, %p150
      %p152 = scmp.ne.s32.totalorder %s143, %s144
      %p153 = scmp.eq.s32.totalorder %s28, 0
      %p154 = por %p152, %p153
      %p155 = scmp.ne.s32.totalorder %s143, %s144
      %p156 = scmp.eq.s32.totalorder %s29, 3
      %p157 = por %p155, %p156
      %p159 = scmp.ne.s32.totalorder %s144, %s158
      %p160 = scmp.eq.s32.totalorder %s29, 0
      %p161 = por %p159, %p160
      %s163 = sadd.s32 %s162, 1
      %p166 = scmp.eq.s32.totalorder %s23, 3
      %p167 = scmp.ne.s32.totalorder %s162, %s164
      %p168 = scmp.eq.s32.totalorder %s23, 0
      %p169 = por %p167, %p168
      %p170 = scmp.ne.s32.totalorder %s162, %s164
      %p171 = scmp.eq.s32.totalorder %s28, 3
      %p172 = por %p170, %p171
      %p173 = scmp.ne.s32.totalorder %s164, %s165
      %p174 = scmp.eq.s32.totalorder %s28, 0
      %p175 = por %p173, %p174
      %p176 = scmp.ne.s32.totalorder %s164, %s165
      %p177 = scmp.eq.s32.totalorder %s29, 3
      %p178 = por %p176, %p177
      %p180 = scmp.ne.s32.totalorder %s165, %s179
      %p181 = scmp.eq.s32.totalorder %s29, 0
      %p182 = por %p180, %p181
      %s184 = sadd.s32 %s183, 1
      %p187 = scmp.eq.s32.totalorder %s23, 3
      %p188 = scmp.ne.s32.totalorder %s183, %s185
      %p189 = scmp.eq.s32.totalorder %s23, 0
      %p190 = por %p188, %p189
      %p191 = scmp.ne.s32.totalorder %s183, %s185
      %p192 = scmp.eq.s32.totalorder %s28, 3
      %p193 = por %p191, %p192
      %p194 = scmp.ne.s32.totalorder %s185, %s186
      %p195 = scmp.eq.s32.totalorder %s28, 0
      %p196 = por %p194, %p195
      %p197 = scmp.ne.s32.totalorder %s185, %s186
      %p198 = scmp.eq.s32.totalorder %s29, 3
      %p199 = por %p197, %p198
      %p201 = scmp.ne.s32.totalorder %s186, %s200
      %p202 = scmp.eq.s32.totalorder %s29, 0
      %p203 = por %p201, %p202
      %s205 = sadd.s32 %s204, 1
      %p208 = scmp.eq.s32.totalorder %s23, 3
      %p209 = scmp.ne.s32.totalorder %s204, %s206
      %p210 = scmp.eq.s32.totalorder %s23, 0
      %p211 = por %p209, %p210
      %p212 = scmp.ne.s32.totalorder %s204, %s206
      %p213 = scmp.eq.s32.totalorder %s28, 3
      %p214 = por %p212, %p213
      %p215 = scmp.ne.s32.totalorder %s206, %s207
      %p216 = scmp.eq.s32.totalorder %s28, 0
      %p217 = por %p215, %p216
      %p218 = scmp.ne.s32.totalorder %s206, %s207
      %p219 = scmp.eq.s32.totalorder %s29, 3
      %p220 = por %p218, %p219
      %p222 = scmp.ne.s32.totalorder %s207, %s221
      %p223 = scmp.eq.s32.totalorder %s29, 0
      %p224 = por %p222, %p223
      %s226 = sadd.s32 %s225, 1
      %p229 = scmp.eq.s32.totalorder %s23, 3
      %p230 = scmp.ne.s32.totalorder %s225, %s227
      %p231 = scmp.eq.s32.totalorder %s23, 0
      %p232 = por %p230, %p231
      %p233 = scmp.ne.s32.totalorder %s225, %s227
      %p234 = scmp.eq.s32.totalorder %s28, 3
      %p235 = por %p233, %p234
      %p236 = scmp.ne.s32.totalorder %s227, %s228
      %p237 = scmp.eq.s32.totalorder %s28, 0
      %p238 = por %p236, %p237
      %p239 = scmp.ne.s32.totalorder %s227, %s228
      %p240 = scmp.eq.s32.totalorder %s29, 3
      %p241 = por %p239, %p240
      %p243 = scmp.ne.s32.totalorder %s228, %s242
      %p244 = scmp.eq.s32.totalorder %s29, 0
      %p245 = por %p243, %p244
      %s247 = sadd.s32 %s246, 1
      %p250 = scmp.eq.s32.totalorder %s23, 3
      %p251 = scmp.ne.s32.totalorder %s246, %s248
      %p252 = scmp.eq.s32.totalorder %s23, 0
      %p253 = por %p251, %p252
      %p254 = scmp.ne.s32.totalorder %s246, %s248
      %p255 = scmp.eq.s32.totalorder %s28, 3
      %p256 = por %p254, %p255
      %p257 = scmp.ne.s32.totalorder %s248, %s249
      %p258 = scmp.eq.s32.totalorder %s28, 0
      %p259 = por %p257, %p258
      %p260 = scmp.ne.s32.totalorder %s248, %s249
      %p261 = scmp.eq.s32.totalorder %s29, 3
      %p262 = por %p260, %p261
      %p264 = scmp.ne.s32.totalorder %s249, %s263
      %p265 = scmp.eq.s32.totalorder %s29, 0
      %p266 = por %p264, %p265
      %s268 = sadd.s32 %s267, 1
      %p271 = scmp.eq.s32.totalorder %s23, 3
      %p272 = scmp.ne.s32.totalorder %s267, %s269
      %p273 = scmp.eq.s32.totalorder %s23, 0
      %p274 = por %p272, %p273
      %p275 = scmp.ne.s32.totalorder %s267, %s269
      %p276 = scmp.eq.s32.totalorder %s28, 3
      %p277 = por %p275, %p276
      %p278 = scmp.ne.s32.totalorder %s269, %s270
      %p279 = scmp.eq.s32.totalorder %s28, 0
      %p280 = por %p278, %p279
      %p281 = scmp.ne.s32.totalorder %s269, %s270
      %p282 = scmp.eq.s32.totalorder %s29, 3
      %p283 = por %p281, %p282
      %p285 = scmp.ne.s32.totalorder %s270, %s284
      %p286 = scmp.eq.s32.totalorder %s29, 0
      %p287 = por %p285, %p286
      %s288 = ssub.s32 %s23, %s30
      %p289 = scmp.eq.s32.totalorder %s288, 0
      %s291 = sadd.s32 %s290, 1
      %s292 = scalar_select %p289, %s290, %s291
      %p295 = pneg %p289
      %p296 = scmp.eq.s32.totalorder %s23, 3
      %p297 = por %p295, %p296
      %p298 = scmp.ne.s32.totalorder %s290, %s293
      %p299 = scmp.eq.s32.totalorder %s23, 0
      %p300 = por %p298, %p299
      %p301 = scmp.ne.s32.totalorder %s290, %s293
      %p302 = scmp.eq.s32.totalorder %s28, 3
      %p303 = por %p301, %p302
      %p304 = scmp.ne.s32.totalorder %s293, %s294
      %p305 = scmp.eq.s32.totalorder %s28, 0
      %p306 = por %p304, %p305
      %p307 = scmp.ne.s32.totalorder %s293, %s294
      %p308 = scmp.eq.s32.totalorder %s29, 3
      %p309 = por %p307, %p308
      %p311 = scmp.ne.s32.totalorder %s294, %s310
      %p312 = scmp.eq.s32.totalorder %s29, 0
      %p313 = por %p311, %p312
      %s314 = ssub.s32 %s23, %s30
      %p315 = scmp.eq.s32.totalorder %s314, 0
      %s317 = sadd.s32 %s316, 1
      %s318 = scalar_select %p315, %s316, %s317
      %p321 = pneg %p315
      %p322 = scmp.eq.s32.totalorder %s23, 3
      %p323 = por %p321, %p322
      %p324 = scmp.ne.s32.totalorder %s316, %s319
      %p325 = scmp.eq.s32.totalorder %s23, 0
      %p326 = por %p324, %p325
      %p327 = scmp.ne.s32.totalorder %s316, %s319
      %p328 = scmp.eq.s32.totalorder %s28, 3
      %p329 = por %p327, %p328
      %p330 = scmp.ne.s32.totalorder %s319, %s320
      %p331 = scmp.eq.s32.totalorder %s28, 0
      %p332 = por %p330, %p331
      %p333 = scmp.ne.s32.totalorder %s319, %s320
      %p334 = scmp.eq.s32.totalorder %s29, 3
      %p335 = por %p333, %p334
      %p337 = scmp.ne.s32.totalorder %s320, %s336
      %p338 = scmp.eq.s32.totalorder %s29, 0
      %p339 = por %p337, %p338
      %p340 = scmp.le.s32.totalorder 1, %s23
      %p341 = scmp.lt.s32.totalorder %s23, 5
      %p342 = pnand %p340, %p341
      %p343 = pneg %p342
      // Predicated region
      $region9: #{tpu_custom_call.1} parent=5 // pred_check
        _
      $region10: #{tpu_custom_call.1} parent=5 // pred_check_branch
        %345 = sbr.rel (%p342) target = $region12
      $region11: #{tpu_custom_call.1} parent=5 // pred_region
        %s346 = ssub.s32 %s23, 1
        // Predicated region
        $region13: #{tpu_custom_call.1} parent=11 // pred_check
          %p347 = pneg %p70
        $region14: #{tpu_custom_call.1} parent=11 // pred_check_branch
          %349 = sbr.rel (%p347) target = $region16
        $region15: #{tpu_custom_call.1} parent=11 // pred_region
          _
        $region16: #{tpu_custom_call.1} parent=11 // pred_fallthru
          _
        // Predicated region
        $region17: #{tpu_custom_call.1} parent=11 // pred_check
          %p350 = pneg %p91
        $region18: #{tpu_custom_call.1} parent=11 // pred_check_branch
          %352 = sbr.rel (%p350) target = $region20
        $region19: #{tpu_custom_call.1} parent=11 // pred_region
          _
        $region20: #{tpu_custom_call.1} parent=11 // pred_fallthru
          _
        // Predicated region
        $region21: #{tpu_custom_call.1} parent=11 // pred_check
          %p353 = pneg %p112
        $region22: #{tpu_custom_call.1} parent=11 // pred_check_branch
          %355 = sbr.rel (%p353) target = $region24
        $region23: #{tpu_custom_call.1} parent=11 // pred_region
          _
        $region24: #{tpu_custom_call.1} parent=11 // pred_fallthru
          _
        // Predicated region
        $region25: #{tpu_custom_call.1} parent=11 // pred_check
          %p356 = pneg %p133
        $region26: #{tpu_custom_call.1} parent=11 // pred_check_branch
          %358 = sbr.rel (%p356) target = $region28
        $region27: #{tpu_custom_call.1} parent=11 // pred_region
          _
        $region28: #{tpu_custom_call.1} parent=11 // pred_fallthru
          _
        // Predicated region
        $region29: #{tpu_custom_call.1} parent=11 // pred_check
          %p359 = pneg %p154
        $region30: #{tpu_custom_call.1} parent=11 // pred_check_branch
          %361 = sbr.rel (%p359) target = $region32
        $region31: #{tpu_custom_call.1} parent=11 // pred_region
          _
        $region32: #{tpu_custom_call.1} parent=11 // pred_fallthru
          _
        // Predicated region
        $region33: #{tpu_custom_call.1} parent=11 // pred_check
          %p362 = pneg %p175
        $region34: #{tpu_custom_call.1} parent=11 // pred_check_branch
          %364 = sbr.rel (%p362) target = $region36
        $region35: #{tpu_custom_call.1} parent=11 // pred_region
          _
        $region36: #{tpu_custom_call.1} parent=11 // pred_fallthru
          _
        // Predicated region
        $region37: #{tpu_custom_call.1} parent=11 // pred_check
          %p365 = pneg %p196
        $region38: #{tpu_custom_call.1} parent=11 // pred_check_branch
          %367 = sbr.rel (%p365) target = $region40
        $region39: #{tpu_custom_call.1} parent=11 // pred_region
          _
        $region40: #{tpu_custom_call.1} parent=11 // pred_fallthru
          _
        // Predicated region
        $region41: #{tpu_custom_call.1} parent=11 // pred_check
          %p368 = pneg %p217
        $region42: #{tpu_custom_call.1} parent=11 // pred_check_branch
          %370 = sbr.rel (%p368) target = $region44
        $region43: #{tpu_custom_call.1} parent=11 // pred_region
          _
        $region44: #{tpu_custom_call.1} parent=11 // pred_fallthru
          _
        // Predicated region
        $region45: #{tpu_custom_call.1} parent=11 // pred_check
          %p371 = pneg %p238
        $region46: #{tpu_custom_call.1} parent=11 // pred_check_branch
          %373 = sbr.rel (%p371) target = $region48
        $region47: #{tpu_custom_call.1} parent=11 // pred_region
          _
        $region48: #{tpu_custom_call.1} parent=11 // pred_fallthru
          _
        // Predicated region
        $region49: #{tpu_custom_call.1} parent=11 // pred_check
          %p374 = pneg %p259
        $region50: #{tpu_custom_call.1} parent=11 // pred_check_branch
          %376 = sbr.rel (%p374) target = $region52
        $region51: #{tpu_custom_call.1} parent=11 // pred_region
          _
        $region52: #{tpu_custom_call.1} parent=11 // pred_fallthru
          _
        // Predicated region
        $region53: #{tpu_custom_call.1} parent=11 // pred_check
          %p377 = pneg %p280
        $region54: #{tpu_custom_call.1} parent=11 // pred_check_branch
          %379 = sbr.rel (%p377) target = $region56
        $region55: #{tpu_custom_call.1} parent=11 // pred_region
          _
        $region56: #{tpu_custom_call.1} parent=11 // pred_fallthru
          _
      $region12: #{tpu_custom_call.1} parent=5 // pred_fallthru
        _
      %p380 = scmp.lt.s32.totalorder %s23, 4
      // Predicated region
      $region57: #{tpu_custom_call.1} parent=5 // pred_check
        %p381 = pneg %p380
      $region58: #{tpu_custom_call.1} parent=5 // pred_check_branch
        %383 = sbr.rel (%p381) target = $region60
      $region59: #{tpu_custom_call.1} parent=5 // pred_region
        // Predicated region
        $region61: #{tpu_custom_call.1} parent=59 // pred_check
          %p384 = pneg %p43
        $region62: #{tpu_custom_call.1} parent=59 // pred_check_branch
          %386 = sbr.rel (%p384) target = $region64
        $region63: #{tpu_custom_call.1} parent=59 // pred_region
          %s387 = smul.u32 2, %s23
          %p388 = scmp.lt.s32.totalorder %s387, 7
          %s389 = scalar_select %p388, %s387, 7
          %s390 = smul.addr %s389, 8
          %s391 = scalar_lea.vmem %s0, %s390
          %s392 = smul.u32 2, %s23
        $region64: #{tpu_custom_call.1} parent=59 // pred_fallthru
          _
      $region60: #{tpu_custom_call.1} parent=5 // pred_fallthru
        _
      %p393 = scmp.le.s32.totalorder 1, %s23
      %p394 = scmp.lt.s32.totalorder %s23, 5
      %p395 = pnand %p393, %p394
      %p396 = pneg %p395
      // Predicated region
      $region65: #{tpu_custom_call.1} parent=5 // pred_check
        _
      $region66: #{tpu_custom_call.1} parent=5 // pred_check_branch
        %398 = sbr.rel (%p395) target = $region68
      $region67: #{tpu_custom_call.1} parent=5 // pred_region
        %s399 = ssub.s32 %s23, 1
        %s400 = smul.u32 2, %s28
        %p401 = scmp.lt.s32.totalorder %s400, 7
        %s402 = scalar_select %p401, %s400, 7
        %s403 = smul.addr %s402, 8
        %s404 = scalar_lea.vmem %s0, %s403
        %p405 = pneg %p49
        %p406 = pneg %p46
        %p407 = pneg %p70
        %p408 = pneg %p67
        %p409 = pneg %p91
        %p410 = pneg %p88
        %p411 = pneg %p112
        %p412 = pneg %p109
        %p413 = pneg %p133
        %p414 = pneg %p130
        %p415 = pneg %p154
        %p416 = pneg %p151
        %p417 = pneg %p175
        %p418 = pneg %p172
        %p419 = pneg %p196
        %p420 = pneg %p193
        %p421 = pneg %p217
        %p422 = pneg %p214
        %p423 = pneg %p238
        %p424 = pneg %p235
        %p425 = pneg %p259
        %p426 = pneg %p256
        %p427 = pneg %p280
        %p428 = pneg %p277
        %p429 = pneg %p306
        %p430 = pneg %p303
        %s431 = smul.u32 2, %s28
        %p432 = scmp.lt.s32.totalorder %s431, 7
        %s433 = scalar_select %p432, %s431, 7
        %s434 = smul.addr %s433, 8
        %s435 = scalar_lea.vmem %s12, %s434
        %p436 = pneg %p332
        %p437 = pneg %p329
        %s438 = sand.u32 %s319, 1
        %s439 = scalar_lea.sflag [#allocation3], %s438
        %s440 = sand.u32 %s319, 1
        %s441 = smul.addr %s440, 16
        %s442 = scalar_lea.vmem [#allocation2], %s441
        %s443 = smul.u32 2, %s28
        %p444 = scmp.lt.s32.totalorder %s443, 7
        %s445 = scalar_select %p444, %s443, 7
        %s446 = smul.addr %s445, 8
        %s447 = scalar_lea.vmem %s0, %s446
        %s448 = smul.u32 2, %s28
        %s449 = smul.u32 2, %s28
        %p450 = scmp.lt.s32.totalorder %s449, 7
        %s451 = scalar_select %p450, %s449, 7
        %s452 = smul.addr %s451, 8
        %s453 = scalar_lea.vmem %s12, %s452
        %s454 = smul.u32 2, %s28
        %s455 = smul.u32 2, %s28
        %v456 = vld [vmem:[%s447] sm:$0xff]
        %v457 = vld [vmem:[%s447 + $0x8] sm:$0xff]
        %v458 = vld [vmem:[%s1] sm:$0x1]
        %v459 = vsub.f32 1.0, %v458
        %v461 = vlaneseq
        %v462 = vshrl.u32 %v461, 7
        %v463 = vsub.s32 0, %v462
        %v464 = vrot.slane %v458, %v463
        %v466 = vmul.f32 %v456, %v464
        %v467 = vmul.f32 %v457, %v464
        %v468 = vld [vmem:[%s2] sm:$0xff]
        %v469 = vld [vmem:[%s3] sm:$0x1]
        %v471 = vlaneseq
        %v472 = vshrl.u32 %v471, 7
        %v473 = vsub.s32 0, %v472
        %v474 = vrot.slane %v469, %v473
        %vm476 = vcmask 64512
        %v478 = vsel %vm476, %v466, 0
        %v481 = vsel %vm476, %v467, 0
        %483 = vmatprep.subr.mxu0 0.0
        %484 = vmatpush1.msra.mxu0 %v468
        %485 = vmatprep.subr.mxu0 0.0
        %486 = vmatpush1.msra.mxu0 0.0
        %487 = vmatprep.subr.mxu0 0.0
        %488 = vmatpush1.msra.mxu0 0.0
        %489 = vmatprep.subr.mxu0 0.0
        %490 = vmatpush1.msra.mxu0 0.0
        %491 = vmatprep.subr.mxu0 0.0
        %492 = vmatpush1.msra.mxu0 0.0
        %493 = vmatprep.subr.mxu0 0.0
        %494 = vmatpush1.msra.mxu0 0.0
        %495 = vmatprep.subr.mxu0 0.0
        %496 = vmatpush1.msra.mxu0 0.0
        %497 = vmatprep.subr.mxu0 0.0
        %498 = vmatpush1.msra.mxu0 0.0
        %499 = vmatprep.subr.mxu0 0.0
        %500 = vmatpush1.msra.mxu0 0.0
        %501 = vmatprep.subr.mxu0 0.0
        %502 = vmatpush1.msra.mxu0 0.0
        %503 = vmatprep.subr.mxu0 0.0
        %504 = vmatpush1.msra.mxu0 0.0
        %505 = vmatprep.subr.mxu0 0.0
        %506 = vmatpush1.msra.mxu0 0.0
        %507 = vmatprep.subr.mxu0 0.0
        %508 = vmatpush1.msra.mxu0 0.0
        %509 = vmatprep.subr.mxu0 0.0
        %510 = vmatpush1.msra.mxu0 0.0
        %511 = vmatprep.subr.mxu0 0.0
        %512 = vmatpush1.msra.mxu0 0.0
        %513 = vmatprep.subr.mxu0 0.0
        %514 = vmatpush1.msra.mxu0 0.0
        %515 = vmatprep.subr.mxu0 0.0
        %516 = vmatpush1.msra.mxu0 0.0
        %517 = vmatprep.subr.mxu0 0.0
        %518 = vmatpush1.msra.mxu0 0.0
        %519 = vmatprep.subr.mxu0 0.0
        %520 = vmatpush1.msra.mxu0 0.0
        %521 = vmatprep.subr.mxu0 0.0
        %522 = vmatpush1.msra.mxu0 0.0
        %523 = vmatprep.subr.mxu0 0.0
        %524 = vmatpush1.msra.mxu0 0.0
        %525 = vmatprep.subr.mxu0 0.0
        %526 = vmatpush1.msra.mxu0 0.0
        %527 = vmatprep.subr.mxu0 0.0
        %528 = vmatpush1.msra.mxu0 0.0
        %529 = vmatprep.subr.mxu0 0.0
        %530 = vmatpush1.msra.mxu0 0.0
        %531 = vmatprep.subr.mxu0 0.0
        %532 = vmatpush1.msra.mxu0 0.0
        %533 = vmatprep.subr.mxu0 0.0
        %534 = vmatpush1.msra.mxu0 0.0
        %535 = vmatprep.subr.mxu0 0.0
        %536 = vmatpush1.msra.mxu0 0.0
        %537 = vmatprep.subr.mxu0 0.0
        %538 = vmatpush1.msra.mxu0 0.0
        %539 = vmatprep.subr.mxu0 0.0
        %540 = vmatpush1.msra.mxu0 0.0
        %541 = vmatprep.subr.mxu0 0.0
        %542 = vmatpush1.msra.mxu0 0.0
        %543 = vmatprep.subr.mxu0 0.0
        %544 = vmatpush1.msra.mxu0 0.0
        %545 = vmatprep.subr.mxu0 0.0
        %546 = vmatpush1.msra.mxu0 0.0
        %547 = vmatprep.mubr.f32.mxu0 0.0
        %548 = vmatmul.mubr.f32.gmra.mrb[0].mxu0 %v478
        %v549 = vpop.f32.mrb[0].mxu0
        %v550 = vadd.f32 %v474, %v549
        %v551 = vpop.f32.mrb[0].mxu0
        %552 = vmatprep.mubr.f32.mxu0 0.0
        %553 = vmatmul.mubr.f32.gmra.mrb[0].mxu0 %v481
        %v554 = vpop.f32.mrb[0].mxu0
        %v555 = vadd.f32 %v474, %v554
        %v556 = vpop.f32.mrb[0].mxu0
        %557 = vdwg.mxu0
        %v558 = vtanh.pop %v550
        %v559 = vtanh.pop %v555
        %v560 = vmax.f32 %v550, 0.0
        %v561 = vmax.f32 %v555, 0.0
        %v562 = vld [vmem:[%s4] sm:$0xff]
        %v563 = vld [vmem:[%s4 + $0x8] sm:$0xff]
        %v564 = vld [vmem:[%s4 + $0x10] sm:$0xff]
        %v565 = vld [vmem:[%s4 + $0x18] sm:$0xff]
        %v566 = vld [vmem:[%s5] sm:$0x1]
        %v568 = vlaneseq
        %v569 = vshrl.u32 %v568, 7
        %v570 = vsub.s32 0, %v569
        %v571 = vrot.slane %v566, %v570
        %vm573 = vcmask 261120
        %v575 = vsel %vm573, %v558, 0
        %v578 = vsel %vm573, %v559, 0
        %580 = vmatprep.subr.mxu0 0.0
        %581 = vmatpush1.msra.mxu0 %v562
        %582 = vmatprep.subr.mxu0 0.0
        %583 = vmatpush1.msra.mxu0 %v563
        %584 = vmatprep.subr.mxu0 0.0
        %585 = vmatpush1.msra.mxu0 %v564
        %586 = vmatprep.subr.mxu0 0.0
        %587 = vmatpush1.msra.mxu0 %v565
        %588 = vmatprep.subr.mxu0 0.0
        %589 = vmatpush1.msra.mxu0 0.0
        %590 = vmatprep.subr.mxu0 0.0
        %591 = vmatpush1.msra.mxu0 0.0
        %592 = vmatprep.subr.mxu0 0.0
        %593 = vmatpush1.msra.mxu0 0.0
        %594 = vmatprep.subr.mxu0 0.0
        %595 = vmatpush1.msra.mxu0 0.0
        %596 = vmatprep.subr.mxu0 0.0
        %597 = vmatpush1.msra.mxu0 0.0
        %598 = vmatprep.subr.mxu0 0.0
        %599 = vmatpush1.msra.mxu0 0.0
        %600 = vmatprep.subr.mxu0 0.0
        %601 = vmatpush1.msra.mxu0 0.0
        %602 = vmatprep.subr.mxu0 0.0
        %603 = vmatpush1.msra.mxu0 0.0
        %604 = vmatprep.subr.mxu0 0.0
        %605 = vmatpush1.msra.mxu0 0.0
        %606 = vmatprep.subr.mxu0 0.0
        %607 = vmatpush1.msra.mxu0 0.0
        %608 = vmatprep.subr.mxu0 0.0
        %609 = vmatpush1.msra.mxu0 0.0
        %610 = vmatprep.subr.mxu0 0.0
        %611 = vmatpush1.msra.mxu0 0.0
        %612 = vmatprep.subr.mxu0 0.0
        %613 = vmatpush1.msra.mxu0 0.0
        %614 = vmatprep.subr.mxu0 0.0
        %615 = vmatpush1.msra.mxu0 0.0
        %616 = vmatprep.subr.mxu0 0.0
        %617 = vmatpush1.msra.mxu0 0.0
        %618 = vmatprep.subr.mxu0 0.0
        %619 = vmatpush1.msra.mxu0 0.0
        %620 = vmatprep.subr.mxu0 0.0
        %621 = vmatpush1.msra.mxu0 0.0
        %622 = vmatprep.subr.mxu0 0.0
        %623 = vmatpush1.msra.mxu0 0.0
        %624 = vmatprep.subr.mxu0 0.0
        %625 = vmatpush1.msra.mxu0 0.0
        %626 = vmatprep.subr.mxu0 0.0
        %627 = vmatpush1.msra.mxu0 0.0
        %628 = vmatprep.subr.mxu0 0.0
        %629 = vmatpush1.msra.mxu0 0.0
        %630 = vmatprep.subr.mxu0 0.0
        %631 = vmatpush1.msra.mxu0 0.0
        %632 = vmatprep.subr.mxu0 0.0
        %633 = vmatpush1.msra.mxu0 0.0
        %634 = vmatprep.subr.mxu0 0.0
        %635 = vmatpush1.msra.mxu0 0.0
        %636 = vmatprep.subr.mxu0 0.0
        %637 = vmatpush1.msra.mxu0 0.0
        %638 = vmatprep.subr.mxu0 0.0
        %639 = vmatpush1.msra.mxu0 0.0
        %640 = vmatprep.subr.mxu0 0.0
        %641 = vmatpush1.msra.mxu0 0.0
        %642 = vmatprep.subr.mxu0 0.0
        %643 = vmatpush1.msra.mxu0 0.0
        %644 = vmatprep.mubr.f32.mxu0 0.0
        %645 = vmatmul.mubr.f32.gmra.mrb[0].mxu0 %v575
        %v646 = vpop.f32.mrb[0].mxu0
        %v647 = vadd.f32 %v571, %v646
        %v648 = vpop.f32.mrb[0].mxu0
        %649 = vmatprep.mubr.f32.mxu0 0.0
        %650 = vmatmul.mubr.f32.gmra.mrb[0].mxu0 %v578
        %v651 = vpop.f32.mrb[0].mxu0
        %v652 = vadd.f32 %v571, %v651
        %v653 = vpop.f32.mrb[0].mxu0
        %654 = vdwg.mxu0
        %v655 = vtanh.pop %v647
        %v656 = vtanh.pop %v652
        %v657 = vld [vmem:[%s6] sm:$0xff]
        %v658 = vld [vmem:[%s6 + $0x8] sm:$0xff]
        %v659 = vld [vmem:[%s6 + $0x10] sm:$0xff]
        %v660 = vld [vmem:[%s6 + $0x18] sm:$0xff]
        %v661 = vld [vmem:[%s7] sm:$0x1]
        %v663 = vlaneseq
        %v664 = vshrl.u32 %v663, 7
        %v665 = vsub.s32 0, %v664
        %v666 = vrot.slane %v661, %v665
        %v669 = vsel %vm573, %v655, 0
        %v672 = vsel %vm573, %v656, 0
        %674 = vmatprep.subr.mxu0 0.0
        %675 = vmatpush1.msra.mxu0 %v657
        %676 = vmatprep.subr.mxu0 0.0
        %677 = vmatpush1.msra.mxu0 %v658
        %678 = vmatprep.subr.mxu0 0.0
        %679 = vmatpush1.msra.mxu0 %v659
        %680 = vmatprep.subr.mxu0 0.0
        %681 = vmatpush1.msra.mxu0 %v660
        %682 = vmatprep.subr.mxu0 0.0
        %683 = vmatpush1.msra.mxu0 0.0
        %684 = vmatprep.subr.mxu0 0.0
        %685 = vmatpush1.msra.mxu0 0.0
        %686 = vmatprep.subr.mxu0 0.0
        %687 = vmatpush1.msra.mxu0 0.0
        %688 = vmatprep.subr.mxu0 0.0
        %689 = vmatpush1.msra.mxu0 0.0
        %690 = vmatprep.subr.mxu0 0.0
        %691 = vmatpush1.msra.mxu0 0.0
        %692 = vmatprep.subr.mxu0 0.0
        %693 = vmatpush1.msra.mxu0 0.0
        %694 = vmatprep.subr.mxu0 0.0
        %695 = vmatpush1.msra.mxu0 0.0
        %696 = vmatprep.subr.mxu0 0.0
        %697 = vmatpush1.msra.mxu0 0.0
        %698 = vmatprep.subr.mxu0 0.0
        %699 = vmatpush1.msra.mxu0 0.0
        %700 = vmatprep.subr.mxu0 0.0
        %701 = vmatpush1.msra.mxu0 0.0
        %702 = vmatprep.subr.mxu0 0.0
        %703 = vmatpush1.msra.mxu0 0.0
        %704 = vmatprep.subr.mxu0 0.0
        %705 = vmatpush1.msra.mxu0 0.0
        %706 = vmatprep.subr.mxu0 0.0
        %707 = vmatpush1.msra.mxu0 0.0
        %708 = vmatprep.subr.mxu0 0.0
        %709 = vmatpush1.msra.mxu0 0.0
        %710 = vmatprep.subr.mxu0 0.0
        %711 = vmatpush1.msra.mxu0 0.0
        %712 = vmatprep.subr.mxu0 0.0
        %713 = vmatpush1.msra.mxu0 0.0
        %714 = vmatprep.subr.mxu0 0.0
        %715 = vmatpush1.msra.mxu0 0.0
        %716 = vmatprep.subr.mxu0 0.0
        %717 = vmatpush1.msra.mxu0 0.0
        %718 = vmatprep.subr.mxu0 0.0
        %719 = vmatpush1.msra.mxu0 0.0
        %720 = vmatprep.subr.mxu0 0.0
        %721 = vmatpush1.msra.mxu0 0.0
        %722 = vmatprep.subr.mxu0 0.0
        %723 = vmatpush1.msra.mxu0 0.0
        %724 = vmatprep.subr.mxu0 0.0
        %725 = vmatpush1.msra.mxu0 0.0
        %726 = vmatprep.subr.mxu0 0.0
        %727 = vmatpush1.msra.mxu0 0.0
        %728 = vmatprep.subr.mxu0 0.0
        %729 = vmatpush1.msra.mxu0 0.0
        %730 = vmatprep.subr.mxu0 0.0
        %731 = vmatpush1.msra.mxu0 0.0
        %732 = vmatprep.subr.mxu0 0.0
        %733 = vmatpush1.msra.mxu0 0.0
        %734 = vmatprep.subr.mxu0 0.0
        %735 = vmatpush1.msra.mxu0 0.0
        %736 = vmatprep.subr.mxu0 0.0
        %737 = vmatpush1.msra.mxu0 0.0
        %738 = vmatprep.mubr.f32.mxu0 0.0
        %739 = vmatmul.mubr.f32.gmra.mrb[0].mxu0 %v669
        %v740 = vpop.f32.mrb[0].mxu0
        %v741 = vadd.f32 %v666, %v740
        %v742 = vpop.f32.mrb[0].mxu0
        %743 = vmatprep.mubr.f32.mxu0 0.0
        %744 = vmatmul.mubr.f32.gmra.mrb[0].mxu0 %v672
        %v745 = vpop.f32.mrb[0].mxu0
        %v746 = vadd.f32 %v666, %v745
        %v747 = vpop.f32.mrb[0].mxu0
        %748 = vdwg.mxu0
        %v750 = vlaneseq
        %v751 = vshrl.u32 %v750, 7
        %v752 = vsub.s32 0, %v751
        %v753 = vrot.slane %v459, %v752
        %v755 = vmul.f32 %v741, %v753
        %v756 = vmul.f32 %v746, %v753
        %v757 = vld [vmem:[%s8] sm:$0xff]
        %v758 = vld [vmem:[%s8 + $0x8] sm:$0xff]
        %v759 = vld [vmem:[%s8 + $0x10] sm:$0xff]
        %v760 = vld [vmem:[%s8 + $0x18] sm:$0xff]
        %v761 = vld [vmem:[%s9] sm:$0x1]
        %v763 = vlaneseq
        %v764 = vshrl.u32 %v763, 7
        %v765 = vsub.s32 0, %v764
        %v766 = vrot.slane %v761, %v765
        %770 = vrot.lane.b32.xlu0 %v560, 96
        %v771 = vpop.permute.xlu0 %770
        %772 = vrot.lane.b32.xlu0 %v561, 96
        %v773 = vpop.permute.xlu0 %772
        %v774 = vsel %vm573, %v771, 0
        %v776 = vsel %vm573, %v773, 0
        %778 = vmatprep.subr.mxu0 0.0
        %779 = vmatpush1.msra.mxu0 %v757
        %780 = vmatprep.subr.mxu0 0.0
        %781 = vmatpush1.msra.mxu0 %v758
        %782 = vmatprep.subr.mxu0 0.0
        %783 = vmatpush1.msra.mxu0 %v759
        %784 = vmatprep.subr.mxu0 0.0
        %785 = vmatpush1.msra.mxu0 %v760
        %786 = vmatprep.subr.mxu0 0.0
        %787 = vmatpush1.msra.mxu0 0.0
        %788 = vmatprep.subr.mxu0 0.0
        %789 = vmatpush1.msra.mxu0 0.0
        %790 = vmatprep.subr.mxu0 0.0
        %791 = vmatpush1.msra.mxu0 0.0
        %792 = vmatprep.subr.mxu0 0.0
        %793 = vmatpush1.msra.mxu0 0.0
        %794 = vmatprep.subr.mxu0 0.0
        %795 = vmatpush1.msra.mxu0 0.0
        %796 = vmatprep.subr.mxu0 0.0
        %797 = vmatpush1.msra.mxu0 0.0
        %798 = vmatprep.subr.mxu0 0.0
        %799 = vmatpush1.msra.mxu0 0.0
        %800 = vmatprep.subr.mxu0 0.0
        %801 = vmatpush1.msra.mxu0 0.0
        %802 = vmatprep.subr.mxu0 0.0
        %803 = vmatpush1.msra.mxu0 0.0
        %804 = vmatprep.subr.mxu0 0.0
        %805 = vmatpush1.msra.mxu0 0.0
        %806 = vmatprep.subr.mxu0 0.0
        %807 = vmatpush1.msra.mxu0 0.0
        %808 = vmatprep.subr.mxu0 0.0
        %809 = vmatpush1.msra.mxu0 0.0
        %810 = vmatprep.subr.mxu0 0.0
        %811 = vmatpush1.msra.mxu0 0.0
        %812 = vmatprep.subr.mxu0 0.0
        %813 = vmatpush1.msra.mxu0 0.0
        %814 = vmatprep.subr.mxu0 0.0
        %815 = vmatpush1.msra.mxu0 0.0
        %816 = vmatprep.subr.mxu0 0.0
        %817 = vmatpush1.msra.mxu0 0.0
        %818 = vmatprep.subr.mxu0 0.0
        %819 = vmatpush1.msra.mxu0 0.0
        %820 = vmatprep.subr.mxu0 0.0
        %821 = vmatpush1.msra.mxu0 0.0
        %822 = vmatprep.subr.mxu0 0.0
        %823 = vmatpush1.msra.mxu0 0.0
        %824 = vmatprep.subr.mxu0 0.0
        %825 = vmatpush1.msra.mxu0 0.0
        %826 = vmatprep.subr.mxu0 0.0
        %827 = vmatpush1.msra.mxu0 0.0
        %828 = vmatprep.subr.mxu0 0.0
        %829 = vmatpush1.msra.mxu0 0.0
        %830 = vmatprep.subr.mxu0 0.0
        %831 = vmatpush1.msra.mxu0 0.0
        %832 = vmatprep.subr.mxu0 0.0
        %833 = vmatpush1.msra.mxu0 0.0
        %834 = vmatprep.subr.mxu0 0.0
        %835 = vmatpush1.msra.mxu0 0.0
        %836 = vmatprep.subr.mxu0 0.0
        %837 = vmatpush1.msra.mxu0 0.0
        %838 = vmatprep.subr.mxu0 0.0
        %839 = vmatpush1.msra.mxu0 0.0
        %840 = vmatprep.subr.mxu0 0.0
        %841 = vmatpush1.msra.mxu0 0.0
        %842 = vmatprep.mubr.f32.mxu0 0.0
        %843 = vmatmul.mubr.f32.gmra.mrb[0].mxu0 %v774
        %v844 = vpop.f32.mrb[0].mxu0
        %v845 = vadd.f32 %v766, %v844
        %v846 = vpop.f32.mrb[0].mxu0
        %847 = vmatprep.mubr.f32.mxu0 0.0
        %848 = vmatmul.mubr.f32.gmra.mrb[0].mxu0 %v776
        %v849 = vpop.f32.mrb[0].mxu0
        %v850 = vadd.f32 %v766, %v849
        %v851 = vpop.f32.mrb[0].mxu0
        %852 = vdwg.mxu0
        %v853 = vmax.f32 %v845, 0.0
        %v854 = vmax.f32 %v850, 0.0
        %v855 = vld [vmem:[%s10] sm:$0xff]
        %v856 = vld [vmem:[%s10 + $0x8] sm:$0xff]
        %v857 = vld [vmem:[%s10 + $0x10] sm:$0xff]
        %v858 = vld [vmem:[%s10 + $0x18] sm:$0xff]
        %v859 = vld [vmem:[%s11] sm:$0x1]
        %v861 = vlaneseq
        %v862 = vshrl.u32 %v861, 7
        %v863 = vsub.s32 0, %v862
        %v864 = vrot.slane %v859, %v863
        %v867 = vsel %vm573, %v853, 0
        %v870 = vsel %vm573, %v854, 0
        %872 = vmatprep.subr.mxu0 0.0
        %873 = vmatpush1.msra.mxu0 %v855
        %874 = vmatprep.subr.mxu0 0.0
        %875 = vmatpush1.msra.mxu0 %v856
        %876 = vmatprep.subr.mxu0 0.0
        %877 = vmatpush1.msra.mxu0 %v857
        %878 = vmatprep.subr.mxu0 0.0
        %879 = vmatpush1.msra.mxu0 %v858
        %880 = vmatprep.subr.mxu0 0.0
        %881 = vmatpush1.msra.mxu0 0.0
        %882 = vmatprep.subr.mxu0 0.0
        %883 = vmatpush1.msra.mxu0 0.0
        %884 = vmatprep.subr.mxu0 0.0
        %885 = vmatpush1.msra.mxu0 0.0
        %886 = vmatprep.subr.mxu0 0.0
        %887 = vmatpush1.msra.mxu0 0.0
        %888 = vmatprep.subr.mxu0 0.0
        %889 = vmatpush1.msra.mxu0 0.0
        %890 = vmatprep.subr.mxu0 0.0
        %891 = vmatpush1.msra.mxu0 0.0
        %892 = vmatprep.subr.mxu0 0.0
        %893 = vmatpush1.msra.mxu0 0.0
        %894 = vmatprep.subr.mxu0 0.0
        %895 = vmatpush1.msra.mxu0 0.0
        %896 = vmatprep.subr.mxu0 0.0
        %897 = vmatpush1.msra.mxu0 0.0
        %898 = vmatprep.subr.mxu0 0.0
        %899 = vmatpush1.msra.mxu0 0.0
        %900 = vmatprep.subr.mxu0 0.0
        %901 = vmatpush1.msra.mxu0 0.0
        %902 = vmatprep.subr.mxu0 0.0
        %903 = vmatpush1.msra.mxu0 0.0
        %904 = vmatprep.subr.mxu0 0.0
        %905 = vmatpush1.msra.mxu0 0.0
        %906 = vmatprep.subr.mxu0 0.0
        %907 = vmatpush1.msra.mxu0 0.0
        %908 = vmatprep.subr.mxu0 0.0
        %909 = vmatpush1.msra.mxu0 0.0
        %910 = vmatprep.subr.mxu0 0.0
        %911 = vmatpush1.msra.mxu0 0.0
        %912 = vmatprep.subr.mxu0 0.0
        %913 = vmatpush1.msra.mxu0 0.0
        %914 = vmatprep.subr.mxu0 0.0
        %915 = vmatpush1.msra.mxu0 0.0
        %916 = vmatprep.subr.mxu0 0.0
        %917 = vmatpush1.msra.mxu0 0.0
        %918 = vmatprep.subr.mxu0 0.0
        %919 = vmatpush1.msra.mxu0 0.0
        %920 = vmatprep.subr.mxu0 0.0
        %921 = vmatpush1.msra.mxu0 0.0
        %922 = vmatprep.subr.mxu0 0.0
        %923 = vmatpush1.msra.mxu0 0.0
        %924 = vmatprep.subr.mxu0 0.0
        %925 = vmatpush1.msra.mxu0 0.0
        %926 = vmatprep.subr.mxu0 0.0
        %927 = vmatpush1.msra.mxu0 0.0
        %928 = vmatprep.subr.mxu0 0.0
        %929 = vmatpush1.msra.mxu0 0.0
        %930 = vmatprep.subr.mxu0 0.0
        %931 = vmatpush1.msra.mxu0 0.0
        %932 = vmatprep.subr.mxu0 0.0
        %933 = vmatpush1.msra.mxu0 0.0
        %934 = vmatprep.subr.mxu0 0.0
        %935 = vmatpush1.msra.mxu0 0.0
        %936 = vmatprep.mubr.f32.mxu0 0.0
        %937 = vmatmul.mubr.f32.gmra.mrb[0].mxu0 %v867
        %v938 = vpop.f32.mrb[0].mxu0
        %v939 = vadd.f32 %v864, %v938
        %v940 = vpop.f32.mrb[0].mxu0
        %941 = vmatprep.mubr.f32.mxu0 0.0
        %942 = vmatmul.mubr.f32.gmra.mrb[0].mxu0 %v870
        %v943 = vpop.f32.mrb[0].mxu0
        %v944 = vadd.f32 %v864, %v943
        %v945 = vpop.f32.mrb[0].mxu0
        %946 = vdwg.mxu0
        %v947 = vmul.f32 %v939, %v753
        %v948 = vmul.f32 %v944, %v753
        %v949 = vmul.f32 %v755, 1.442695
        %v950 = vpow.pop %v949
        %v951 = vmul.f32 %v756, 1.442695
        %v952 = vpow.pop %v951
        %v953 = vmul.f32 %v456, %v950
        %v954 = vmul.f32 %v457, %v952
        %v955 = vadd.f32 %v953, %v947
        %v956 = vadd.f32 %v954, %v948
        %v957 = vsel %vm476, %v755, 0.0
        %958 = vadd.xlane.f32.xlu0 %v957
        %v959 = vpop.xlane.xlu0 %958
        %v960 = vsel %vm476, %v756, 0.0
        %961 = vadd.xlane.f32.xlu0 %v960
        %v962 = vpop.xlane.xlu0 %961
        %963 = vst.msk [vmem:[%s453] sm:$0xff] %vm476, %v955
        %964 = vst.msk [vmem:[%s453 + $0x8] sm:$0xff] %vm476, %v956
        %965 = vst [vmem:[%s442] sm:$0xff] %v959
        %966 = vst [vmem:[%s442 + $0x8] sm:$0xff] %v962
        %s967 = smul.u32 2, %s28
        %p968 = scmp.lt.s32.totalorder %s967, 7
        %s969 = scalar_select %p968, %s967, 7
        %s970 = smul.addr %s969, 8
        %s971 = scalar_lea.vmem %s12, %s970
        %s972 = sand.u32 %s319, 1
        %s973 = scalar_lea.sflag [#allocation3], %s972
        %s974 = sand.u32 %s319, 1
        %s975 = smul.addr %s974, 16
        %s976 = scalar_lea.vmem [#allocation2], %s975
        // Predicated region
        $region69: #{tpu_custom_call.1} parent=67 // pred_check
          %p977 = pneg %p303
        $region70: #{tpu_custom_call.1} parent=67 // pred_check_branch
          %979 = sbr.rel (%p977) target = $region72
        $region71: #{tpu_custom_call.1} parent=67 // pred_region
          %s980 = smul.u32 2, %s28
        $region72: #{tpu_custom_call.1} parent=67 // pred_fallthru
          _
        // Predicated region
        $region73: #{tpu_custom_call.1} parent=67 // pred_check
          %p981 = pneg %p329
        $region74: #{tpu_custom_call.1} parent=67 // pred_check_branch
          %983 = sbr.rel (%p981) target = $region76
        $region75: #{tpu_custom_call.1} parent=67 // pred_region
          %s984 = smul.u32 2, %s28
          %s986 = ssub.s32 256, 256
          %987 = vsyncadd %s973, %s986
          %s988 = smul.addr %s984, 128
          %s989 = scalar_lea.hbm %s13, %s988
          %s990 = sshll.u32 %s976, 4
          %s991 = int_to_ptr.vmem [resolvable:$true] %s990
          %996 = dma.vmem_to_hbm [thread:$0]  %s991, 256, %s989, %s973, 128, 128, 8
        $region76: #{tpu_custom_call.1} parent=67 // pred_fallthru
          _
      $region68: #{tpu_custom_call.1} parent=5 // pred_fallthru
        _
      %p997 = scmp.le.s32.totalorder 2, %s23
      // Predicated region
      $region77: #{tpu_custom_call.1} parent=5 // pred_check
        %p998 = pneg %p997
      $region78: #{tpu_custom_call.1} parent=5 // pred_check_branch
        %1000 = sbr.rel (%p998) target = $region80
      $region79: #{tpu_custom_call.1} parent=5 // pred_region
        %s1001 = ssub.s32 %s23, 2
        // Predicated region
        $region81: #{tpu_custom_call.1} parent=79 // pred_check
          %p1002 = pneg %p309
        $region82: #{tpu_custom_call.1} parent=79 // pred_check_branch
          %1004 = sbr.rel (%p1002) target = $region84
        $region83: #{tpu_custom_call.1} parent=79 // pred_region
          %s1005 = smul.u32 2, %s29
          %p1006 = scmp.lt.s32.totalorder %s1005, 7
          %s1007 = scalar_select %p1006, %s1005, 7
          %s1008 = smul.addr %s1007, 8
          %s1009 = scalar_lea.vmem %s12, %s1008
        $region84: #{tpu_custom_call.1} parent=79 // pred_fallthru
          _
        // Predicated region
        $region85: #{tpu_custom_call.1} parent=79 // pred_check
          %p1010 = pneg %p335
        $region86: #{tpu_custom_call.1} parent=79 // pred_check_branch
          %1012 = sbr.rel (%p1010) target = $region88
        $region87: #{tpu_custom_call.1} parent=79 // pred_region
          %s1013 = sand.u32 %s320, 1
          %s1014 = scalar_lea.sflag [#allocation3], %s1013
          %s1015 = sand.u32 %s320, 1
          %s1016 = smul.addr %s1015, 16
          %s1017 = scalar_lea.vmem [#allocation2], %s1016
          %1018 = dma.done %s1014, 256
        $region88: #{tpu_custom_call.1} parent=79 // pred_fallthru
          _
      $region80: #{tpu_custom_call.1} parent=5 // pred_fallthru
        _
    $region6: #{tpu_custom_call.1} parent=1 // loop_footer
      %s27 = sadd.s32 1, %s23
    $region7: #{tpu_custom_call.1} parent=1 // loop_footer_branch
      %22 = sbr.rel target = $region3
    $region8: #{tpu_custom_call.1} parent=1 // loop_exit
      _
    %1019 = vsyncpa [#allocation3], 1
    %s1020 = scalar_lea.sflag [#allocation3], 1
    %1021 = vsyncpa %s1020, 1

</llo_original>
